<compile_context>
chip_gen: v7x
topology: tpu7x:2x2x1
jax: 0.10.0
libtpu: 0.0.40
codegen_flags: <defaults>
</compile_context>

<pallas_src>
import functools

import jax
import jax.numpy as jnp
from jax.experimental import pallas as pl
from jax.experimental.pallas import tpu as pltpu

EPS = 1e-5  # torch.nn.LayerNorm default


def _round_up(x, m):
    return ((x + m - 1) // m) * m


def _myembed_kernel(sum_ref, logp_ref, coef_ref,
                    w1_ref, b1_ref, g1_ref, be1_ref,
                    w2_ref, b2_ref, g0_ref, be0_ref,
                    out_ref, *, pack, e_dim):
    # SMEM scalars: analytic LayerNorm(H) statistics of h = lp*w1 + b1.
    mw1 = coef_ref[0]
    mb1 = coef_ref[1]
    vw1 = coef_ref[2]
    vb1 = coef_ref[3]
    cwb = coef_ref[4]

    w1 = w1_ref[...]          # (1, H)
    b1 = b1_ref[...]
    g1 = g1_ref[...]
    be1 = be1_ref[...]
    w2 = w2_ref[...]          # (H, E)
    b2 = b2_ref[...]          # (1, E)
    g0 = g0_ref[...]          # (1, E)
    be0 = be0_ref[...]

    # Each 128-lane packed row holds `pack` original rows of width e_dim.
    # Process one 32-lane group at a time (static unrolled loop) to keep the
    # live intermediate set small at large row tiles.
    for g in range(pack):
        lo = g * e_dim

        # ---- base path: LayerNorm over E of (word + pos + token_type) ----
        xg = sum_ref[:, lo:lo + e_dim].astype(jnp.float32)        # (bm, E)
        mu = jnp.mean(xg, axis=-1, keepdims=True)
        xc = xg - mu
        var = jnp.mean(xc * xc, axis=-1, keepdims=True)
        base = xc * jax.lax.rsqrt(var + EPS) * g0 + be0

        # ---- extra path: prob_embed(log_probs.unsqueeze(-1)) ----
        lp = logp_ref[:, g:g + 1].astype(jnp.float32)             # (bm, 1)
        h = lp * w1 + b1                                          # (bm, H)
        hm = lp * mw1 + mb1                                       # analytic mean
        hv = lp * lp * vw1 + 2.0 * lp * cwb + vb1                 # analytic var
        hn = (h - hm) * jax.lax.rsqrt(hv + EPS) * g1 + be1        # LayerNorm(H)
        hs = hn * jax.nn.sigmoid(hn)                              # SiLU (EUP)
        extra = jnp.dot(hs, w2, preferred_element_type=jnp.float32) + b2

        out_ref[:, lo:lo + e_dim] = (base + extra).astype(out_ref.dtype)


def myembed_forward(params, input_ids, token_type_ids, position_ids, log_probs,
                    *, block_rows=2048):
    """Forward pass of MyEmbed (with log_probs set)."""
    B, S = input_ids.shape
    E = params["word_emb"].shape[1]
    H = params["w1"].shape[1]
    assert 128 % E == 0, "embedding dim must divide the 128-lane width"
    PACK = 128 // E
    LANES = PACK * E                      # 128

    # ---------- glue: embedding gathers + sum (fused by XLA) ----------
    # TODO(synk): the table gathers stay in XLA; fusing them into the kernel
    # (VMEM-resident tables / pl.Element row gathers) would save one (N,E) HBM
    # round-trip but needs a dynamic-gather path not attempted here.
    word = jnp.take(params["word_emb"], input_ids.reshape(-1), axis=0)
    pos = jnp.take(params["pos_emb"], position_ids.reshape(-1), axis=0)
    tok = jnp.take(params["type_emb"], token_type_ids.reshape(-1), axis=0)
    summed = (word + pos + tok).astype(jnp.float32)               # (N, E)
    logp = log_probs.reshape(-1).astype(jnp.float32)              # (N,)

    N = B * S
    n4 = (N + PACK - 1) // PACK                                   # packed rows
    bm = max(8, min(block_rows // PACK, _round_up(n4, 8)))        # rows / tile
    bm = _round_up(bm, 8)
    n4p = _round_up(n4, bm)
    n_full = n4p * PACK
    pad = n_full - N
    if pad:
        summed = jnp.pad(summed, ((0, pad), (0, 0)))
        logp = jnp.pad(logp, ((0, pad),))

    # lane-dense packing: 4 original rows per 128-lane row (free bitcast).
    summed_p = summed.reshape(n4p, LANES)
    logp_p = logp.reshape(n4p, PACK)

    # analytic LayerNorm(H) statistics of h = lp*w1 + b1 (biased, torch-style)
    w1v = params["w1"][0].astype(jnp.float32)
    b1v = params["b1"][0].astype(jnp.float32)
    mw1 = jnp.mean(w1v)
    mb1 = jnp.mean(b1v)
    vw1 = jnp.mean(w1v * w1v) - mw1 * mw1
    vb1 = jnp.mean(b1v * b1v) - mb1 * mb1
    cwb = jnp.mean(w1v * b1v) - mw1 * mb1
    coef = jnp.concatenate(
        [jnp.stack([mw1, mb1, vw1, vb1, cwb]), jnp.zeros((3,), jnp.float32)]
    ).astype(jnp.float32)                                          # (8,)

    row = lambda shape: pl.BlockSpec(shape, lambda i: (i, 0))
    rep = lambda shape: pl.BlockSpec(shape, lambda i: (0, 0))

    kernel = functools.partial(_myembed_kernel, pack=PACK, e_dim=E)

    out = pl.pallas_call(
        kernel,
        out_shape=jax.ShapeDtypeStruct((n4p, LANES), jnp.float32),
        grid_spec=pltpu.PrefetchScalarGridSpec(
            num_scalar_prefetch=0,
            grid=(n4p // bm,),
            in_specs=[
                row((bm, LANES)),                                   # packed summed
                row((bm, PACK)),                                    # packed log_probs
                pl.BlockSpec(memory_space=pltpu.MemorySpace.SMEM),  # LN coefficients
                rep((1, H)),                                        # w1
                rep((1, H)),                                        # b1
                rep((1, H)),                                        # gamma1
                rep((1, H)),                                        # beta1
                rep((H, E)),                                        # w2
                rep((1, E)),                                        # b2
                rep((1, E)),                                        # gamma0
                rep((1, E)),                                        # beta0
            ],
            out_specs=row((bm, LANES)),
        ),
        compiler_params=pltpu.CompilerParams(
            dimension_semantics=("parallel",)),
    )(summed_p, logp_p, coef,
      params["w1"], params["b1"], params["g1"], params["be1"],
      params["w2"], params["b2"], params["g0"], params["be0"])

    return out.reshape(n_full, E)[:N].reshape(B, S, E)


def _xavier_uniform(key, shape):
    fan_in, fan_out = shape
    bound = jnp.sqrt(6.0 / (fan_in + fan_out))
    return jax.random.uniform(key, shape, jnp.float32, -bound, bound)


def make_params(key, vocab_size, max_pos, type_vocab, emb_dim, hidden=128):
    ks = jax.random.split(key, 8)
    return {
        # inner_embed (BERT-embeddings-like)
        "word_emb": jax.random.normal(ks[0], (vocab_size, emb_dim), jnp.float32) * 0.02,
        "pos_emb":  jax.random.normal(ks[1], (max_pos, emb_dim), jnp.float32) * 0.02,
        "type_emb": jax.random.normal(ks[2], (type_vocab, emb_dim), jnp.float32) * 0.02,
        "g0":  jnp.ones((1, emb_dim), jnp.float32),
        "be0": jnp.zeros((1, emb_dim), jnp.float32),
        # prob_embed: Linear(1,128) -> LayerNorm(128) -> SiLU -> Linear(128,emb_dim)
        "w1":  _xavier_uniform(ks[3], (1, hidden)),        # torch (128,1) stored as (1,128)
        "b1":  jnp.zeros((1, hidden), jnp.float32),
        "g1":  jnp.ones((1, hidden), jnp.float32),
        "be1": jnp.zeros((1, hidden), jnp.float32),
        "w2":  _xavier_uniform(ks[4], (hidden, emb_dim)),  # torch (emb_dim,128) transposed
        "b2":  jnp.zeros((1, emb_dim), jnp.float32),
    }


def _reference(params, input_ids, token_type_ids, position_ids, log_probs):
    # pure-JAX reference of the same math (for sanity check)
    word = jnp.take(params["word_emb"], input_ids, axis=0)
    pos = jnp.take(params["pos_emb"], position_ids, axis=0)
    tok = jnp.take(params["type_emb"], token_type_ids, axis=0)
    x = word + pos + tok
    mu = jnp.mean(x, -1, keepdims=True)
    var = jnp.mean((x - mu) ** 2, -1, keepdims=True)
    base = (x - mu) * jax.lax.rsqrt(var + EPS) * params["g0"][0] + params["be0"][0]
    lp = log_probs[..., None]
    h = lp * params["w1"][0] + params["b1"][0]
    hm = jnp.mean(h, -1, keepdims=True)
    hv = jnp.mean((h - hm) ** 2, -1, keepdims=True)
    h = (h - hm) * jax.lax.rsqrt(hv + EPS) * params["g1"][0] + params["be1"][0]
    h = h * jax.nn.sigmoid(h)
    extra = h @ params["w2"] + params["b2"][0]
    return base + extra


if __name__ == "__main__":
    key = jax.random.PRNGKey(0)
    B, S, E = 2, 8, 32
    VOCAB, MAX_POS, TYPES = 100, 64, 2

    pkey, ikey, tkey, lkey = jax.random.split(key, 4)
    params = make_params(pkey, VOCAB, MAX_POS, TYPES, E)

    input_ids = jax.random.randint(ikey, (B, S), 0, VOCAB, jnp.int32)
    token_type_ids = jax.random.randint(tkey, (B, S), 0, TYPES, jnp.int32)
    position_ids = jnp.broadcast_to(jnp.arange(S, dtype=jnp.int32), (B, S))
    log_probs = -jax.random.uniform(lkey, (B, S), jnp.float32) * 5.0

    fwd = jax.jit(myembed_forward)
    out = fwd(params, input_ids, token_type_ids, position_ids, log_probs)
    out = jax.block_until_ready(out)

    ref = _reference(params, input_ids, token_type_ids, position_ids, log_probs)
    assert out.shape == (B, S, E)
    assert jnp.allclose(out, ref, atol=2e-4, rtol=2e-4), "mismatch vs reference"

    # TODO(synk): inner_embed dropout is omitted (eval-mode identity).
    print("KERNEL_OK")
</pallas_src>

<mosaic_0001>
module attributes {stable_mosaic.version = 11 : i64} {
  func.func @_myembed_kernel(%arg0: i32, %arg1: memref<8x128xf32, #tpu.memory_space<vmem>>, %arg2: memref<8x4xf32, #tpu.memory_space<vmem>>, %arg3: memref<8xf32, #tpu.memory_space<smem>>, %arg4: memref<1x128xf32, #tpu.memory_space<vmem>>, %arg5: memref<1x128xf32, #tpu.memory_space<vmem>>, %arg6: memref<1x128xf32, #tpu.memory_space<vmem>>, %arg7: memref<1x128xf32, #tpu.memory_space<vmem>>, %arg8: memref<128x32xf32, #tpu.memory_space<vmem>>, %arg9: memref<1x32xf32, #tpu.memory_space<vmem>>, %arg10: memref<1x32xf32, #tpu.memory_space<vmem>>, %arg11: memref<1x32xf32, #tpu.memory_space<vmem>>, %arg12: memref<8x128xf32, #tpu.memory_space<vmem>>) attributes {dimension_semantics = [#tpu.dimension_semantics<parallel>], iteration_bounds = array<i64: 1>, scalar_prefetch = 0 : i64, scratch_operands = 0 : i64, tpu.core_type = #tpu.core_type<tc>, window_params = [{transform_indices = @transform_0, window_bounds = array<i64: 8, 128>}, {transform_indices = @transform_1, window_bounds = array<i64: 8, 4>}, {transform_indices = @transform_2, window_bounds = array<i64: 8>}, {pipeline_mode = #tpu.pipeline_mode<synchronous>, transform_indices = @transform_3, window_bounds = array<i64: 1, 128>}, {pipeline_mode = #tpu.pipeline_mode<synchronous>, transform_indices = @transform_4, window_bounds = array<i64: 1, 128>}, {pipeline_mode = #tpu.pipeline_mode<synchronous>, transform_indices = @transform_5, window_bounds = array<i64: 1, 128>}, {pipeline_mode = #tpu.pipeline_mode<synchronous>, transform_indices = @transform_6, window_bounds = array<i64: 1, 128>}, {pipeline_mode = #tpu.pipeline_mode<synchronous>, transform_indices = @transform_7, window_bounds = array<i64: 128, 32>}, {pipeline_mode = #tpu.pipeline_mode<synchronous>, transform_indices = @transform_8, window_bounds = array<i64: 1, 32>}, {pipeline_mode = #tpu.pipeline_mode<synchronous>, transform_indices = @transform_9, window_bounds = array<i64: 1, 32>}, {pipeline_mode = #tpu.pipeline_mode<synchronous>, transform_indices = @transform_10, window_bounds = array<i64: 1, 32>}, {transform_indices = @transform_11, window_bounds = array<i64: 8, 128>}]} {
    %c0 = arith.constant 0 : index
    %0 = memref.load %arg3[%c0] : memref<8xf32, #tpu.memory_space<smem>>
    %c1 = arith.constant 1 : index
    %1 = memref.load %arg3[%c1] : memref<8xf32, #tpu.memory_space<smem>>
    %c2 = arith.constant 2 : index
    %2 = memref.load %arg3[%c2] : memref<8xf32, #tpu.memory_space<smem>>
    %c3 = arith.constant 3 : index
    %3 = memref.load %arg3[%c3] : memref<8xf32, #tpu.memory_space<smem>>
    %c4 = arith.constant 4 : index
    %4 = memref.load %arg3[%c4] : memref<8xf32, #tpu.memory_space<smem>>
    %c0_0 = arith.constant 0 : index
    %c0_1 = arith.constant 0 : index
    %5 = vector.load %arg4[%c0_0, %c0_1] : memref<1x128xf32, #tpu.memory_space<vmem>>, vector<1x128xf32>
    %c0_2 = arith.constant 0 : index
    %c0_3 = arith.constant 0 : index
    %6 = vector.load %arg5[%c0_2, %c0_3] : memref<1x128xf32, #tpu.memory_space<vmem>>, vector<1x128xf32>
    %c0_4 = arith.constant 0 : index
    %c0_5 = arith.constant 0 : index
    %7 = vector.load %arg6[%c0_4, %c0_5] : memref<1x128xf32, #tpu.memory_space<vmem>>, vector<1x128xf32>
    %c0_6 = arith.constant 0 : index
    %c0_7 = arith.constant 0 : index
    %8 = vector.load %arg7[%c0_6, %c0_7] : memref<1x128xf32, #tpu.memory_space<vmem>>, vector<1x128xf32>
    %c0_8 = arith.constant 0 : index
    %c0_9 = arith.constant 0 : index
    %9 = vector.load %arg8[%c0_8, %c0_9] : memref<128x32xf32, #tpu.memory_space<vmem>>, vector<128x32xf32>
    %c0_10 = arith.constant 0 : index
    %c0_11 = arith.constant 0 : index
    %10 = vector.load %arg9[%c0_10, %c0_11] : memref<1x32xf32, #tpu.memory_space<vmem>>, vector<1x32xf32>
    %c0_12 = arith.constant 0 : index
    %c0_13 = arith.constant 0 : index
    %11 = vector.load %arg10[%c0_12, %c0_13] : memref<1x32xf32, #tpu.memory_space<vmem>>, vector<1x32xf32>
    %c0_14 = arith.constant 0 : index
    %c0_15 = arith.constant 0 : index
    %12 = vector.load %arg11[%c0_14, %c0_15] : memref<1x32xf32, #tpu.memory_space<vmem>>, vector<1x32xf32>
    %c0_16 = arith.constant 0 : index
    %c0_17 = arith.constant 0 : index
    %13 = vector.load %arg1[%c0_16, %c0_17] : memref<8x128xf32, #tpu.memory_space<vmem>>, vector<8x32xf32>
    %cst = arith.constant dense<0.000000e+00> : vector<8xf32>
    %14 = vector.multi_reduction <add>, %13, %cst [1] : vector<8x32xf32> to vector<8xf32>
    %15 = vector.shape_cast %14 : vector<8xf32> to vector<8x1xf32>
    %cst_18 = arith.constant 3.200000e+01 : f32
    %16 = vector.broadcast %cst_18 : f32 to vector<8x1xf32>
    %17 = arith.divf %15, %16 : vector<8x1xf32>
    %18 = vector.broadcast %17 : vector<8x1xf32> to vector<8x32xf32>
    %19 = arith.subf %13, %18 : vector<8x32xf32>
    %20 = arith.mulf %19, %19 : vector<8x32xf32>
    %cst_19 = arith.constant dense<0.000000e+00> : vector<8xf32>
    %21 = vector.multi_reduction <add>, %20, %cst_19 [1] : vector<8x32xf32> to vector<8xf32>
    %22 = vector.shape_cast %21 : vector<8xf32> to vector<8x1xf32>
    %cst_20 = arith.constant 3.200000e+01 : f32
    %23 = vector.broadcast %cst_20 : f32 to vector<8x1xf32>
    %24 = arith.divf %22, %23 : vector<8x1xf32>
    %cst_21 = arith.constant 9.99999974E-6 : f32
    %25 = vector.broadcast %cst_21 : f32 to vector<8x1xf32>
    %26 = arith.addf %24, %25 : vector<8x1xf32>
    %27 = math.rsqrt %26 : vector<8x1xf32>
    %28 = vector.broadcast %27 : vector<8x1xf32> to vector<8x32xf32>
    %29 = arith.mulf %19, %28 : vector<8x32xf32>
    %30 = vector.broadcast %11 : vector<1x32xf32> to vector<8x32xf32>
    %31 = arith.mulf %29, %30 : vector<8x32xf32>
    %32 = vector.broadcast %12 : vector<1x32xf32> to vector<8x32xf32>
    %33 = arith.addf %31, %32 : vector<8x32xf32>
    %c0_22 = arith.constant 0 : index
    %c0_23 = arith.constant 0 : index
    %34 = vector.load %arg2[%c0_22, %c0_23] : memref<8x4xf32, #tpu.memory_space<vmem>>, vector<8x1xf32>
    %35 = vector.broadcast %34 : vector<8x1xf32> to vector<8x128xf32>
    %36 = vector.broadcast %5 : vector<1x128xf32> to vector<8x128xf32>
    %37 = arith.mulf %35, %36 : vector<8x128xf32>
    %38 = vector.broadcast %6 : vector<1x128xf32> to vector<8x128xf32>
    %39 = arith.addf %37, %38 : vector<8x128xf32>
    %40 = vector.broadcast %0 : f32 to vector<8x1xf32>
    %41 = arith.mulf %34, %40 : vector<8x1xf32>
    %42 = vector.broadcast %1 : f32 to vector<8x1xf32>
    %43 = arith.addf %41, %42 : vector<8x1xf32>
    %44 = arith.mulf %34, %34 : vector<8x1xf32>
    %45 = vector.broadcast %2 : f32 to vector<8x1xf32>
    %46 = arith.mulf %44, %45 : vector<8x1xf32>
    %cst_24 = arith.constant 2.000000e+00 : f32
    %47 = vector.broadcast %cst_24 : f32 to vector<8x1xf32>
    %48 = arith.mulf %47, %34 : vector<8x1xf32>
    %49 = vector.broadcast %4 : f32 to vector<8x1xf32>
    %50 = arith.mulf %48, %49 : vector<8x1xf32>
    %51 = arith.addf %46, %50 : vector<8x1xf32>
    %52 = vector.broadcast %3 : f32 to vector<8x1xf32>
    %53 = arith.addf %51, %52 : vector<8x1xf32>
    %54 = vector.broadcast %43 : vector<8x1xf32> to vector<8x128xf32>
    %55 = arith.subf %39, %54 : vector<8x128xf32>
    %cst_25 = arith.constant 9.99999974E-6 : f32
    %56 = vector.broadcast %cst_25 : f32 to vector<8x1xf32>
    %57 = arith.addf %53, %56 : vector<8x1xf32>
    %58 = math.rsqrt %57 : vector<8x1xf32>
    %59 = vector.broadcast %58 : vector<8x1xf32> to vector<8x128xf32>
    %60 = arith.mulf %55, %59 : vector<8x128xf32>
    %61 = vector.broadcast %7 : vector<1x128xf32> to vector<8x128xf32>
    %62 = arith.mulf %60, %61 : vector<8x128xf32>
    %63 = vector.broadcast %8 : vector<1x128xf32> to vector<8x128xf32>
    %64 = arith.addf %62, %63 : vector<8x128xf32>
    %65 = arith.negf %64 : vector<8x128xf32>
    %66 = math.exp %65 : vector<8x128xf32>
    %cst_26 = arith.constant 1.000000e+00 : f32
    %67 = vector.broadcast %cst_26 : f32 to vector<8x128xf32>
    %68 = arith.addf %67, %66 : vector<8x128xf32>
    %69 = arith.divf %67, %68 : vector<8x128xf32>
    %70 = arith.mulf %64, %69 : vector<8x128xf32>
    %cst_27 = arith.constant dense<0.000000e+00> : vector<8x32xf32>
    %71 = tpu.matmul %70, %9, %cst_27 {dimension_numbers = #tpu.dot_dimension_numbers<[1], [0], [0], [1], [0, 0, 1, 1], [], []>} : vector<8x128xf32>, vector<128x32xf32>, vector<8x32xf32> -> vector<8x32xf32>
    %72 = vector.broadcast %10 : vector<1x32xf32> to vector<8x32xf32>
    %73 = arith.addf %71, %72 : vector<8x32xf32>
    %74 = arith.addf %33, %73 : vector<8x32xf32>
    %c0_28 = arith.constant 0 : index
    %c0_29 = arith.constant 0 : index
    %75 = vector.load %arg12[%c0_28, %c0_29] : memref<8x128xf32, #tpu.memory_space<vmem>>, vector<8x32xf32>
    tpu.vector_store %arg12[%c0_28, %c0_29], %74 {strides = array<i32>} : memref<8x128xf32, #tpu.memory_space<vmem>>, vector<8x32xf32>,
    %c0_30 = arith.constant 0 : index
    %c32 = arith.constant 32 : index
    %76 = vector.load %arg1[%c0_30, %c32] : memref<8x128xf32, #tpu.memory_space<vmem>>, vector<8x32xf32>
    %cst_31 = arith.constant dense<0.000000e+00> : vector<8xf32>
    %77 = vector.multi_reduction <add>, %76, %cst_31 [1] : vector<8x32xf32> to vector<8xf32>
    %78 = vector.shape_cast %77 : vector<8xf32> to vector<8x1xf32>
    %cst_32 = arith.constant 3.200000e+01 : f32
    %79 = vector.broadcast %cst_32 : f32 to vector<8x1xf32>
    %80 = arith.divf %78, %79 : vector<8x1xf32>
    %81 = vector.broadcast %80 : vector<8x1xf32> to vector<8x32xf32>
    %82 = arith.subf %76, %81 : vector<8x32xf32>
    %83 = arith.mulf %82, %82 : vector<8x32xf32>
    %cst_33 = arith.constant dense<0.000000e+00> : vector<8xf32>
    %84 = vector.multi_reduction <add>, %83, %cst_33 [1] : vector<8x32xf32> to vector<8xf32>
    %85 = vector.shape_cast %84 : vector<8xf32> to vector<8x1xf32>
    %cst_34 = arith.constant 3.200000e+01 : f32
    %86 = vector.broadcast %cst_34 : f32 to vector<8x1xf32>
    %87 = arith.divf %85, %86 : vector<8x1xf32>
    %cst_35 = arith.constant 9.99999974E-6 : f32
    %88 = vector.broadcast %cst_35 : f32 to vector<8x1xf32>
    %89 = arith.addf %87, %88 : vector<8x1xf32>
    %90 = math.rsqrt %89 : vector<8x1xf32>
    %91 = vector.broadcast %90 : vector<8x1xf32> to vector<8x32xf32>
    %92 = arith.mulf %82, %91 : vector<8x32xf32>
    %93 = vector.broadcast %11 : vector<1x32xf32> to vector<8x32xf32>
    %94 = arith.mulf %92, %93 : vector<8x32xf32>
    %95 = vector.broadcast %12 : vector<1x32xf32> to vector<8x32xf32>
    %96 = arith.addf %94, %95 : vector<8x32xf32>
    %c0_36 = arith.constant 0 : index
    %c1_37 = arith.constant 1 : index
    %97 = vector.load %arg2[%c0_36, %c1_37] : memref<8x4xf32, #tpu.memory_space<vmem>>, vector<8x1xf32>
    %98 = vector.broadcast %97 : vector<8x1xf32> to vector<8x128xf32>
    %99 = vector.broadcast %5 : vector<1x128xf32> to vector<8x128xf32>
    %100 = arith.mulf %98, %99 : vector<8x128xf32>
    %101 = vector.broadcast %6 : vector<1x128xf32> to vector<8x128xf32>
    %102 = arith.addf %100, %101 : vector<8x128xf32>
    %103 = vector.broadcast %0 : f32 to vector<8x1xf32>
    %104 = arith.mulf %97, %103 : vector<8x1xf32>
    %105 = vector.broadcast %1 : f32 to vector<8x1xf32>
    %106 = arith.addf %104, %105 : vector<8x1xf32>
    %107 = arith.mulf %97, %97 : vector<8x1xf32>
    %108 = vector.broadcast %2 : f32 to vector<8x1xf32>
    %109 = arith.mulf %107, %108 : vector<8x1xf32>
    %cst_38 = arith.constant 2.000000e+00 : f32
    %110 = vector.broadcast %cst_38 : f32 to vector<8x1xf32>
    %111 = arith.mulf %110, %97 : vector<8x1xf32>
    %112 = vector.broadcast %4 : f32 to vector<8x1xf32>
    %113 = arith.mulf %111, %112 : vector<8x1xf32>
    %114 = arith.addf %109, %113 : vector<8x1xf32>
    %115 = vector.broadcast %3 : f32 to vector<8x1xf32>
    %116 = arith.addf %114, %115 : vector<8x1xf32>
    %117 = vector.broadcast %106 : vector<8x1xf32> to vector<8x128xf32>
    %118 = arith.subf %102, %117 : vector<8x128xf32>
    %cst_39 = arith.constant 9.99999974E-6 : f32
    %119 = vector.broadcast %cst_39 : f32 to vector<8x1xf32>
    %120 = arith.addf %116, %119 : vector<8x1xf32>
    %121 = math.rsqrt %120 : vector<8x1xf32>
    %122 = vector.broadcast %121 : vector<8x1xf32> to vector<8x128xf32>
    %123 = arith.mulf %118, %122 : vector<8x128xf32>
    %124 = vector.broadcast %7 : vector<1x128xf32> to vector<8x128xf32>
    %125 = arith.mulf %123, %124 : vector<8x128xf32>
    %126 = vector.broadcast %8 : vector<1x128xf32> to vector<8x128xf32>
    %127 = arith.addf %125, %126 : vector<8x128xf32>
    %128 = arith.negf %127 : vector<8x128xf32>
    %129 = math.exp %128 : vector<8x128xf32>
    %cst_40 = arith.constant 1.000000e+00 : f32
    %130 = vector.broadcast %cst_40 : f32 to vector<8x128xf32>
    %131 = arith.addf %130, %129 : vector<8x128xf32>
    %132 = arith.divf %130, %131 : vector<8x128xf32>
    %133 = arith.mulf %127, %132 : vector<8x128xf32>
    %cst_41 = arith.constant dense<0.000000e+00> : vector<8x32xf32>
    %134 = tpu.matmul %133, %9, %cst_41 {dimension_numbers = #tpu.dot_dimension_numbers<[1], [0], [0], [1], [0, 0, 1, 1], [], []>} : vector<8x128xf32>, vector<128x32xf32>, vector<8x32xf32> -> vector<8x32xf32>
    %135 = vector.broadcast %10 : vector<1x32xf32> to vector<8x32xf32>
    %136 = arith.addf %134, %135 : vector<8x32xf32>
    %137 = arith.addf %96, %136 : vector<8x32xf32>
    %c0_42 = arith.constant 0 : index
    %c32_43 = arith.constant 32 : index
    %138 = vector.load %arg12[%c0_42, %c32_43] : memref<8x128xf32, #tpu.memory_space<vmem>>, vector<8x32xf32>
    tpu.vector_store %arg12[%c0_42, %c32_43], %137 {strides = array<i32>} : memref<8x128xf32, #tpu.memory_space<vmem>>, vector<8x32xf32>,
    %c0_44 = arith.constant 0 : index
    %c64 = arith.constant 64 : index
    %139 = vector.load %arg1[%c0_44, %c64] : memref<8x128xf32, #tpu.memory_space<vmem>>, vector<8x32xf32>
    %cst_45 = arith.constant dense<0.000000e+00> : vector<8xf32>
    %140 = vector.multi_reduction <add>, %139, %cst_45 [1] : vector<8x32xf32> to vector<8xf32>
    %141 = vector.shape_cast %140 : vector<8xf32> to vector<8x1xf32>
    %cst_46 = arith.constant 3.200000e+01 : f32
    %142 = vector.broadcast %cst_46 : f32 to vector<8x1xf32>
    %143 = arith.divf %141, %142 : vector<8x1xf32>
    %144 = vector.broadcast %143 : vector<8x1xf32> to vector<8x32xf32>
    %145 = arith.subf %139, %144 : vector<8x32xf32>
    %146 = arith.mulf %145, %145 : vector<8x32xf32>
    %cst_47 = arith.constant dense<0.000000e+00> : vector<8xf32>
    %147 = vector.multi_reduction <add>, %146, %cst_47 [1] : vector<8x32xf32> to vector<8xf32>
    %148 = vector.shape_cast %147 : vector<8xf32> to vector<8x1xf32>
    %cst_48 = arith.constant 3.200000e+01 : f32
    %149 = vector.broadcast %cst_48 : f32 to vector<8x1xf32>
    %150 = arith.divf %148, %149 : vector<8x1xf32>
    %cst_49 = arith.constant 9.99999974E-6 : f32
    %151 = vector.broadcast %cst_49 : f32 to vector<8x1xf32>
    %152 = arith.addf %150, %151 : vector<8x1xf32>
    %153 = math.rsqrt %152 : vector<8x1xf32>
    %154 = vector.broadcast %153 : vector<8x1xf32> to vector<8x32xf32>
    %155 = arith.mulf %145, %154 : vector<8x32xf32>
    %156 = vector.broadcast %11 : vector<1x32xf32> to vector<8x32xf32>
    %157 = arith.mulf %155, %156 : vector<8x32xf32>
    %158 = vector.broadcast %12 : vector<1x32xf32> to vector<8x32xf32>
    %159 = arith.addf %157, %158 : vector<8x32xf32>
    %c0_50 = arith.constant 0 : index
    %c2_51 = arith.constant 2 : index
    %160 = vector.load %arg2[%c0_50, %c2_51] : memref<8x4xf32, #tpu.memory_space<vmem>>, vector<8x1xf32>
    %161 = vector.broadcast %160 : vector<8x1xf32> to vector<8x128xf32>
    %162 = vector.broadcast %5 : vector<1x128xf32> to vector<8x128xf32>
    %163 = arith.mulf %161, %162 : vector<8x128xf32>
    %164 = vector.broadcast %6 : vector<1x128xf32> to vector<8x128xf32>
    %165 = arith.addf %163, %164 : vector<8x128xf32>
    %166 = vector.broadcast %0 : f32 to vector<8x1xf32>
    %167 = arith.mulf %160, %166 : vector<8x1xf32>
    %168 = vector.broadcast %1 : f32 to vector<8x1xf32>
    %169 = arith.addf %167, %168 : vector<8x1xf32>
    %170 = arith.mulf %160, %160 : vector<8x1xf32>
    %171 = vector.broadcast %2 : f32 to vector<8x1xf32>
    %172 = arith.mulf %170, %171 : vector<8x1xf32>
    %cst_52 = arith.constant 2.000000e+00 : f32
    %173 = vector.broadcast %cst_52 : f32 to vector<8x1xf32>
    %174 = arith.mulf %173, %160 : vector<8x1xf32>
    %175 = vector.broadcast %4 : f32 to vector<8x1xf32>
    %176 = arith.mulf %174, %175 : vector<8x1xf32>
    %177 = arith.addf %172, %176 : vector<8x1xf32>
    %178 = vector.broadcast %3 : f32 to vector<8x1xf32>
    %179 = arith.addf %177, %178 : vector<8x1xf32>
    %180 = vector.broadcast %169 : vector<8x1xf32> to vector<8x128xf32>
    %181 = arith.subf %165, %180 : vector<8x128xf32>
    %cst_53 = arith.constant 9.99999974E-6 : f32
    %182 = vector.broadcast %cst_53 : f32 to vector<8x1xf32>
    %183 = arith.addf %179, %182 : vector<8x1xf32>
    %184 = math.rsqrt %183 : vector<8x1xf32>
    %185 = vector.broadcast %184 : vector<8x1xf32> to vector<8x128xf32>
    %186 = arith.mulf %181, %185 : vector<8x128xf32>
    %187 = vector.broadcast %7 : vector<1x128xf32> to vector<8x128xf32>
    %188 = arith.mulf %186, %187 : vector<8x128xf32>
    %189 = vector.broadcast %8 : vector<1x128xf32> to vector<8x128xf32>
    %190 = arith.addf %188, %189 : vector<8x128xf32>
    %191 = arith.negf %190 : vector<8x128xf32>
    %192 = math.exp %191 : vector<8x128xf32>
    %cst_54 = arith.constant 1.000000e+00 : f32
    %193 = vector.broadcast %cst_54 : f32 to vector<8x128xf32>
    %194 = arith.addf %193, %192 : vector<8x128xf32>
    %195 = arith.divf %193, %194 : vector<8x128xf32>
    %196 = arith.mulf %190, %195 : vector<8x128xf32>
    %cst_55 = arith.constant dense<0.000000e+00> : vector<8x32xf32>
    %197 = tpu.matmul %196, %9, %cst_55 {dimension_numbers = #tpu.dot_dimension_numbers<[1], [0], [0], [1], [0, 0, 1, 1], [], []>} : vector<8x128xf32>, vector<128x32xf32>, vector<8x32xf32> -> vector<8x32xf32>
    %198 = vector.broadcast %10 : vector<1x32xf32> to vector<8x32xf32>
    %199 = arith.addf %197, %198 : vector<8x32xf32>
    %200 = arith.addf %159, %199 : vector<8x32xf32>
    %c0_56 = arith.constant 0 : index
    %c64_57 = arith.constant 64 : index
    %201 = vector.load %arg12[%c0_56, %c64_57] : memref<8x128xf32, #tpu.memory_space<vmem>>, vector<8x32xf32>
    tpu.vector_store %arg12[%c0_56, %c64_57], %200 {strides = array<i32>} : memref<8x128xf32, #tpu.memory_space<vmem>>, vector<8x32xf32>,
    %c0_58 = arith.constant 0 : index
    %c96 = arith.constant 96 : index
    %202 = vector.load %arg1[%c0_58, %c96] : memref<8x128xf32, #tpu.memory_space<vmem>>, vector<8x32xf32>
    %cst_59 = arith.constant dense<0.000000e+00> : vector<8xf32>
    %203 = vector.multi_reduction <add>, %202, %cst_59 [1] : vector<8x32xf32> to vector<8xf32>
    %204 = vector.shape_cast %203 : vector<8xf32> to vector<8x1xf32>
    %cst_60 = arith.constant 3.200000e+01 : f32
    %205 = vector.broadcast %cst_60 : f32 to vector<8x1xf32>
    %206 = arith.divf %204, %205 : vector<8x1xf32>
    %207 = vector.broadcast %206 : vector<8x1xf32> to vector<8x32xf32>
    %208 = arith.subf %202, %207 : vector<8x32xf32>
    %209 = arith.mulf %208, %208 : vector<8x32xf32>
    %cst_61 = arith.constant dense<0.000000e+00> : vector<8xf32>
    %210 = vector.multi_reduction <add>, %209, %cst_61 [1] : vector<8x32xf32> to vector<8xf32>
    %211 = vector.shape_cast %210 : vector<8xf32> to vector<8x1xf32>
    %cst_62 = arith.constant 3.200000e+01 : f32
    %212 = vector.broadcast %cst_62 : f32 to vector<8x1xf32>
    %213 = arith.divf %211, %212 : vector<8x1xf32>
    %cst_63 = arith.constant 9.99999974E-6 : f32
    %214 = vector.broadcast %cst_63 : f32 to vector<8x1xf32>
    %215 = arith.addf %213, %214 : vector<8x1xf32>
    %216 = math.rsqrt %215 : vector<8x1xf32>
    %217 = vector.broadcast %216 : vector<8x1xf32> to vector<8x32xf32>
    %218 = arith.mulf %208, %217 : vector<8x32xf32>
    %219 = vector.broadcast %11 : vector<1x32xf32> to vector<8x32xf32>
    %220 = arith.mulf %218, %219 : vector<8x32xf32>
    %221 = vector.broadcast %12 : vector<1x32xf32> to vector<8x32xf32>
    %222 = arith.addf %220, %221 : vector<8x32xf32>
    %c0_64 = arith.constant 0 : index
    %c3_65 = arith.constant 3 : index
    %223 = vector.load %arg2[%c0_64, %c3_65] : memref<8x4xf32, #tpu.memory_space<vmem>>, vector<8x1xf32>
    %224 = vector.broadcast %223 : vector<8x1xf32> to vector<8x128xf32>
    %225 = vector.broadcast %5 : vector<1x128xf32> to vector<8x128xf32>
    %226 = arith.mulf %224, %225 : vector<8x128xf32>
    %227 = vector.broadcast %6 : vector<1x128xf32> to vector<8x128xf32>
    %228 = arith.addf %226, %227 : vector<8x128xf32>
    %229 = vector.broadcast %0 : f32 to vector<8x1xf32>
    %230 = arith.mulf %223, %229 : vector<8x1xf32>
    %231 = vector.broadcast %1 : f32 to vector<8x1xf32>
    %232 = arith.addf %230, %231 : vector<8x1xf32>
    %233 = arith.mulf %223, %223 : vector<8x1xf32>
    %234 = vector.broadcast %2 : f32 to vector<8x1xf32>
    %235 = arith.mulf %233, %234 : vector<8x1xf32>
    %cst_66 = arith.constant 2.000000e+00 : f32
    %236 = vector.broadcast %cst_66 : f32 to vector<8x1xf32>
    %237 = arith.mulf %236, %223 : vector<8x1xf32>
    %238 = vector.broadcast %4 : f32 to vector<8x1xf32>
    %239 = arith.mulf %237, %238 : vector<8x1xf32>
    %240 = arith.addf %235, %239 : vector<8x1xf32>
    %241 = vector.broadcast %3 : f32 to vector<8x1xf32>
    %242 = arith.addf %240, %241 : vector<8x1xf32>
    %243 = vector.broadcast %232 : vector<8x1xf32> to vector<8x128xf32>
    %244 = arith.subf %228, %243 : vector<8x128xf32>
    %cst_67 = arith.constant 9.99999974E-6 : f32
    %245 = vector.broadcast %cst_67 : f32 to vector<8x1xf32>
    %246 = arith.addf %242, %245 : vector<8x1xf32>
    %247 = math.rsqrt %246 : vector<8x1xf32>
    %248 = vector.broadcast %247 : vector<8x1xf32> to vector<8x128xf32>
    %249 = arith.mulf %244, %248 : vector<8x128xf32>
    %250 = vector.broadcast %7 : vector<1x128xf32> to vector<8x128xf32>
    %251 = arith.mulf %249, %250 : vector<8x128xf32>
    %252 = vector.broadcast %8 : vector<1x128xf32> to vector<8x128xf32>
    %253 = arith.addf %251, %252 : vector<8x128xf32>
    %254 = arith.negf %253 : vector<8x128xf32>
    %255 = math.exp %254 : vector<8x128xf32>
    %cst_68 = arith.constant 1.000000e+00 : f32
    %256 = vector.broadcast %cst_68 : f32 to vector<8x128xf32>
    %257 = arith.addf %256, %255 : vector<8x128xf32>
    %258 = arith.divf %256, %257 : vector<8x128xf32>
    %259 = arith.mulf %253, %258 : vector<8x128xf32>
    %cst_69 = arith.constant dense<0.000000e+00> : vector<8x32xf32>
    %260 = tpu.matmul %259, %9, %cst_69 {dimension_numbers = #tpu.dot_dimension_numbers<[1], [0], [0], [1], [0, 0, 1, 1], [], []>} : vector<8x128xf32>, vector<128x32xf32>, vector<8x32xf32> -> vector<8x32xf32>
    %261 = vector.broadcast %10 : vector<1x32xf32> to vector<8x32xf32>
    %262 = arith.addf %260, %261 : vector<8x32xf32>
    %263 = arith.addf %222, %262 : vector<8x32xf32>
    %c0_70 = arith.constant 0 : index
    %c96_71 = arith.constant 96 : index
    %264 = vector.load %arg12[%c0_70, %c96_71] : memref<8x128xf32, #tpu.memory_space<vmem>>, vector<8x32xf32>
    tpu.vector_store %arg12[%c0_70, %c96_71], %263 {strides = array<i32>} : memref<8x128xf32, #tpu.memory_space<vmem>>, vector<8x32xf32>,
    return
  }
  func.func @transform_0(%arg0: i32) -> (i32, i32) {
    %c0_i32 = arith.constant 0 : i32
    %c0_i32_0 = arith.constant 0 : i32
    return %arg0, %c0_i32 : i32, i32
  }
  func.func @transform_1(%arg0: i32) -> (i32, i32) {
    %c0_i32 = arith.constant 0 : i32
    %c0_i32_0 = arith.constant 0 : i32
    return %arg0, %c0_i32 : i32, i32
  }
  func.func @transform_2(%arg0: i32) -> i32 {
    %c0_i32 = arith.constant 0 : i32
    %c0_i32_0 = arith.constant 0 : i32
    return %c0_i32 : i32
  }
  func.func @transform_3(%arg0: i32) -> (i32, i32) {
    %c0_i32 = arith.constant 0 : i32
    %c0_i32_0 = arith.constant 0 : i32
    %c0_i32_1 = arith.constant 0 : i32
    return %c0_i32, %c0_i32_0 : i32, i32
  }
  func.func @transform_4(%arg0: i32) -> (i32, i32) {
    %c0_i32 = arith.constant 0 : i32
    %c0_i32_0 = arith.constant 0 : i32
    %c0_i32_1 = arith.constant 0 : i32
    return %c0_i32, %c0_i32_0 : i32, i32
  }
  func.func @transform_5(%arg0: i32) -> (i32, i32) {
    %c0_i32 = arith.constant 0 : i32
    %c0_i32_0 = arith.constant 0 : i32
    %c0_i32_1 = arith.constant 0 : i32
    return %c0_i32, %c0_i32_0 : i32, i32
  }
  func.func @transform_6(%arg0: i32) -> (i32, i32) {
    %c0_i32 = arith.constant 0 : i32
    %c0_i32_0 = arith.constant 0 : i32
    %c0_i32_1 = arith.constant 0 : i32
    return %c0_i32, %c0_i32_0 : i32, i32
  }
  func.func @transform_7(%arg0: i32) -> (i32, i32) {
    %c0_i32 = arith.constant 0 : i32
    %c0_i32_0 = arith.constant 0 : i32
    %c0_i32_1 = arith.constant 0 : i32
    return %c0_i32, %c0_i32_0 : i32, i32
  }
  func.func @transform_8(%arg0: i32) -> (i32, i32) {
    %c0_i32 = arith.constant 0 : i32
    %c0_i32_0 = arith.constant 0 : i32
    %c0_i32_1 = arith.constant 0 : i32
    return %c0_i32, %c0_i32_0 : i32, i32
  }
  func.func @transform_9(%arg0: i32) -> (i32, i32) {
    %c0_i32 = arith.constant 0 : i32
    %c0_i32_0 = arith.constant 0 : i32
    %c0_i32_1 = arith.constant 0 : i32
    return %c0_i32, %c0_i32_0 : i32, i32
  }
  func.func @transform_10(%arg0: i32) -> (i32, i32) {
    %c0_i32 = arith.constant 0 : i32
    %c0_i32_0 = arith.constant 0 : i32
    %c0_i32_1 = arith.constant 0 : i32
    return %c0_i32, %c0_i32_0 : i32, i32
  }
  func.func @transform_11(%arg0: i32) -> (i32, i32) {
    %c0_i32 = arith.constant 0 : i32
    %c0_i32_0 = arith.constant 0 : i32
    return %arg0, %c0_i32 : i32, i32
  }
}

</mosaic_0001>

<llo_original>
// kernel: myembed_forward.1
$region0: #{myembed_forward.1}
  #allocation0 [shape = 'u32[]', space=smem, size = 0x4, offset = 0x4, fixed_abs, tag = 'smem constant byte address 0x4 - core index']
  #allocation1 [shape = 'u32[144,128]{1,0:T(1,128)}', space=vmem, size = 0x12000, scoped, tag = 'internal scratch']
  %s0 = inlined_call_operand.vmem [shape: f32[8,128], index: 0, kind: input, shape index: {}]
  %s1 = inlined_call_operand.vmem [shape: f32[8,4], index: 1, kind: input, shape index: {}]
  %s2 = inlined_call_operand.vmem [shape: f32[8], index: 2, kind: input, shape index: {}]
  %s3 = inlined_call_operand.vmem [shape: f32[1,128], index: 3, kind: input, shape index: {}]
  %s4 = inlined_call_operand.vmem [shape: f32[1,128], index: 4, kind: input, shape index: {}]
  %s5 = inlined_call_operand.vmem [shape: f32[1,128], index: 5, kind: input, shape index: {}]
  %s6 = inlined_call_operand.vmem [shape: f32[1,128], index: 6, kind: input, shape index: {}]
  %s7 = inlined_call_operand.vmem [shape: f32[128,32], index: 7, kind: input, shape index: {}]
  %s8 = inlined_call_operand.vmem [shape: f32[1,32], index: 8, kind: input, shape index: {}]
  %s9 = inlined_call_operand.vmem [shape: f32[1,32], index: 9, kind: input, shape index: {}]
  %s10 = inlined_call_operand.vmem [shape: f32[1,32], index: 10, kind: input, shape index: {}]
  %s11 = inlined_call_operand.vmem [shape: f32[8,128], index: 11, kind: output, shape index: {}]
  %s12 = sld [smem:[#allocation0]]
  $region58: #{myembed_forward.1} parent=0
    _
  %s14 = ssub.s32 1, %s12
  %s15 = scalar_select 0, %s14, %s12
  $region1: #{myembed_forward.1} parent=0
    #allocation2 [shape = 'u8[512]{0}', space=smem, size = 0x200, scoped, tag = 'input window, operand 2, single buffered']
    #allocation3 [shape = 's32[1]{0}', space=sflag, size = 0x4, scoped, tag = 'scoped memory for myembed_forward.1']
    %16 = vsyncpa [#allocation3], 0
    // Predicated region
    $region2: #{myembed_forward.1} parent=1 // pred_check
      _
    $region3: #{myembed_forward.1} parent=1 // pred_check_branch
      %18 = sbr.rel (0) target = $region5
    $region4: #{myembed_forward.1} parent=1 // pred_region
      _
    $region5: #{myembed_forward.1} parent=1 // pred_fallthru
      _
    // Predicated region
    $region6: #{myembed_forward.1} parent=1 // pred_check
      _
    $region7: #{myembed_forward.1} parent=1 // pred_check_branch
      %20 = sbr.rel (0) target = $region9
    $region8: #{myembed_forward.1} parent=1 // pred_region
      _
    $region9: #{myembed_forward.1} parent=1 // pred_fallthru
      _
    // Predicated region
    $region10: #{myembed_forward.1} parent=1 // pred_check
      _
    $region11: #{myembed_forward.1} parent=1 // pred_check_branch
      %22 = sbr.rel (0) target = $region13
    $region12: #{myembed_forward.1} parent=1 // pred_region
      %s24 = ssub.s32 16, 16
      %25 = vsyncadd [#allocation3], %s24
      %s27 = sshll.u32 %s2, 4
      %s28 = int_to_ptr.vmem [resolvable:$true] %s27
      %30 = dma.vmem_to_smem %s28, 16, [#allocation2], [#allocation3]
    $region13: #{myembed_forward.1} parent=1 // pred_fallthru
      _
    // Predicated region
    $region14: #{myembed_forward.1} parent=1 // pred_check
      _
    $region15: #{myembed_forward.1} parent=1 // pred_check_branch
      %32 = sbr.rel (0) target = $region17
    $region16: #{myembed_forward.1} parent=1 // pred_region
      _
    $region17: #{myembed_forward.1} parent=1 // pred_fallthru
      _
    // Predicated region
    $region18: #{myembed_forward.1} parent=1 // pred_check
      _
    $region19: #{myembed_forward.1} parent=1 // pred_check_branch
      %34 = sbr.rel (0) target = $region21
    $region20: #{myembed_forward.1} parent=1 // pred_region
      _
    $region21: #{myembed_forward.1} parent=1 // pred_fallthru
      _
    // Predicated region
    $region22: #{myembed_forward.1} parent=1 // pred_check
      _
    $region23: #{myembed_forward.1} parent=1 // pred_check_branch
      %36 = sbr.rel (0) target = $region25
    $region24: #{myembed_forward.1} parent=1 // pred_region
      _
    $region25: #{myembed_forward.1} parent=1 // pred_fallthru
      _
    // Predicated region
    $region26: #{myembed_forward.1} parent=1 // pred_check
      _
    $region27: #{myembed_forward.1} parent=1 // pred_check_branch
      %38 = sbr.rel (0) target = $region29
    $region28: #{myembed_forward.1} parent=1 // pred_region
      _
    $region29: #{myembed_forward.1} parent=1 // pred_fallthru
      _
    // Predicated region
    $region30: #{myembed_forward.1} parent=1 // pred_check
      _
    $region31: #{myembed_forward.1} parent=1 // pred_check_branch
      %40 = sbr.rel (0) target = $region33
    $region32: #{myembed_forward.1} parent=1 // pred_region
      _
    $region33: #{myembed_forward.1} parent=1 // pred_fallthru
      _
    // Predicated region
    $region34: #{myembed_forward.1} parent=1 // pred_check
      _
    $region35: #{myembed_forward.1} parent=1 // pred_check_branch
      %42 = sbr.rel (0) target = $region37
    $region36: #{myembed_forward.1} parent=1 // pred_region
      _
    $region37: #{myembed_forward.1} parent=1 // pred_fallthru
      _
    // Predicated region
    $region38: #{myembed_forward.1} parent=1 // pred_check
      _
    $region39: #{myembed_forward.1} parent=1 // pred_check_branch
      %44 = sbr.rel (0) target = $region41
    $region40: #{myembed_forward.1} parent=1 // pred_region
      _
    $region41: #{myembed_forward.1} parent=1 // pred_fallthru
      _
    // Predicated region
    $region42: #{myembed_forward.1} parent=1 // pred_check
      _
    $region43: #{myembed_forward.1} parent=1 // pred_check_branch
      %46 = sbr.rel (0) target = $region45
    $region44: #{myembed_forward.1} parent=1 // pred_region
      _
    $region45: #{myembed_forward.1} parent=1 // pred_fallthru
      _
    // Predicated region
    $region46: #{myembed_forward.1} parent=1 // pred_check
      _
    $region47: #{myembed_forward.1} parent=1 // pred_check_branch
      %48 = sbr.rel (0) target = $region49
    $region48: #{myembed_forward.1} parent=1 // pred_region
      %49 = dma.done [#allocation3], 16
    $region49: #{myembed_forward.1} parent=1 // pred_fallthru
      _
    %50 = sfence
    %s51 = sld [smem:[#allocation2]]
    %s52 = sld [smem:[#allocation2 + $0x1]]
    %s53 = sld [smem:[#allocation2 + $0x2]]
    %s54 = sld [smem:[#allocation2 + $0x3]]
    %s55 = sld [smem:[#allocation2 + $0x4]]
    %v56 = vld [vmem:[%s3] sm:$0x1]
    %v57 = vld [vmem:[%s4] sm:$0x1]
    %v58 = vld [vmem:[%s5] sm:$0x1]
    %v59 = vld [vmem:[%s6] sm:$0x1]
    %v60 = vld [vmem:[%s7] sm:$0xff]
    %v61 = vld [vmem:[%s7 + $0x8] sm:$0xff]
    %v62 = vld [vmem:[%s7 + $0x10] sm:$0xff]
    %v63 = vld [vmem:[%s7 + $0x18] sm:$0xff]
    %v64 = vld [vmem:[%s7 + $0x20] sm:$0xff]
    %v65 = vld [vmem:[%s7 + $0x28] sm:$0xff]
    %v66 = vld [vmem:[%s7 + $0x30] sm:$0xff]
    %v67 = vld [vmem:[%s7 + $0x38] sm:$0xff]
    %v68 = vld [vmem:[%s7 + $0x40] sm:$0xff]
    %v69 = vld [vmem:[%s7 + $0x48] sm:$0xff]
    %v70 = vld [vmem:[%s7 + $0x50] sm:$0xff]
    %v71 = vld [vmem:[%s7 + $0x58] sm:$0xff]
    %v72 = vld [vmem:[%s7 + $0x60] sm:$0xff]
    %v73 = vld [vmem:[%s7 + $0x68] sm:$0xff]
    %v74 = vld [vmem:[%s7 + $0x70] sm:$0xff]
    %v75 = vld [vmem:[%s7 + $0x78] sm:$0xff]
    %v76 = vld [vmem:[%s8] sm:$0x1]
    %v77 = vld [vmem:[%s9] sm:$0x1]
    %v78 = vld [vmem:[%s10] sm:$0x1]
    %v79 = vld [vmem:[%s0] sm:$0xff]
    %vm80 = vcmask 261120
    %v81 = vsel %vm80, %v79, 0.0
    %82 = vadd.xlane.f32.xlu0 %v81
    %v83 = vpop.xlane.xlu0 %82
    %v84 = vrcp.pop 32.0
    %v85 = vmul.f32 %v83, %v84
    %v86 = vsub.f32 %v79, %v85
    %v87 = vmul.f32 %v86, %v86
    %v88 = vsel %vm80, %v87, 0.0
    %89 = vadd.xlane.f32.xlu0 %v88
    %v90 = vpop.xlane.xlu0 %89
    %v91 = vmul.f32 %v90, %v84
    %v92 = vadd.f32 %v91, 1e-05
    %v93 = vrsqrt.pop %v92
    %v94 = vmul.f32 %v86, %v93
    %v96 = vlaneseq
    %v97 = vshrl.u32 %v96, 7
    %v98 = vsub.s32 0, %v97
    %v99 = vrot.slane %v77, %v98
    %v101 = vmul.f32 %v94, %v99
    %v103 = vlaneseq
    %v104 = vshrl.u32 %v103, 7
    %v105 = vsub.s32 0, %v104
    %v106 = vrot.slane %v78, %v105
    %v108 = vadd.f32 %v101, %v106
    %v109 = vld [vmem:[%s1] sm:$0xff]
    %111 = vset.pattern.permute.xlu0 0
    %112 = vperm.xlu0 %111, %v109
    %v113 = vpop.permute.xlu0 %112
    %v116 = vlaneseq
    %v117 = vshrl.u32 %v116, 7
    %v118 = vsub.s32 0, %v117
    %v119 = vrot.slane %v56, %v118
    %v121 = vmul.f32 %v113, %v119
    %v123 = vlaneseq
    %v124 = vshrl.u32 %v123, 7
    %v125 = vsub.s32 0, %v124
    %v126 = vrot.slane %v57, %v125
    %v128 = vadd.f32 %v121, %v126
    %v129 = vstv %s51
    %v130 = vmul.f32 %v109, %v129
    %v131 = vstv %s52
    %v132 = vadd.f32 %v130, %v131
    %v133 = vmul.f32 %v109, %v109
    %v134 = vstv %s53
    %v135 = vmul.f32 %v133, %v134
    %v136 = vmul.f32 %v109, 2.0
    %v137 = vstv %s55
    %v138 = vmul.f32 %v136, %v137
    %v139 = vadd.f32 %v135, %v138
    %v140 = vstv %s54
    %v141 = vadd.f32 %v139, %v140
    %143 = vset.pattern.permute.xlu0 0
    %144 = vperm.xlu0 %143, %v132
    %v145 = vpop.permute.xlu0 %144
    %v147 = vsub.f32 %v128, %v145
    %v148 = vadd.f32 %v141, 1e-05
    %v149 = vrsqrt.pop %v148
    %151 = vset.pattern.permute.xlu0 0
    %152 = vperm.xlu0 %151, %v149
    %v153 = vpop.permute.xlu0 %152
    %v155 = vmul.f32 %v147, %v153
    %v157 = vlaneseq
    %v158 = vshrl.u32 %v157, 7
    %v159 = vsub.s32 0, %v158
    %v160 = vrot.slane %v58, %v159
    %v162 = vmul.f32 %v155, %v160
    %v164 = vlaneseq
    %v165 = vshrl.u32 %v164, 7
    %v166 = vsub.s32 0, %v165
    %v167 = vrot.slane %v59, %v166
    %v169 = vadd.f32 %v162, %v167
    %v170 = vxor.u32 %v169, 2147483648
    %v171 = vmul.f32 %v170, 1.442695
    %v172 = vpow.pop %v171
    %v173 = vadd.f32 %v172, 1.0
    %v174 = vrcp.pop %v173
    %v175 = vmul.f32 1.0, %v174
    %v176 = vmul.f32 %v169, %v175
    %v178 = vlaneseq
    %v179 = vshrl.u32 %v178, 7
    %v180 = vsub.s32 0, %v179
    %v181 = vrot.slane %v76, %v180
    %183 = vmatprep.subr.mxu0 0.0
    %184 = vmatpush1.msra.mxu0 %v60
    %185 = vmatprep.subr.mxu0 0.0
    %186 = vmatpush1.msra.mxu0 %v61
    %187 = vmatprep.subr.mxu0 0.0
    %188 = vmatpush1.msra.mxu0 %v62
    %189 = vmatprep.subr.mxu0 0.0
    %190 = vmatpush1.msra.mxu0 %v63
    %191 = vmatprep.subr.mxu0 0.0
    %192 = vmatpush1.msra.mxu0 %v64
    %193 = vmatprep.subr.mxu0 0.0
    %194 = vmatpush1.msra.mxu0 %v65
    %195 = vmatprep.subr.mxu0 0.0
    %196 = vmatpush1.msra.mxu0 %v66
    %197 = vmatprep.subr.mxu0 0.0
    %198 = vmatpush1.msra.mxu0 %v67
    %199 = vmatprep.subr.mxu0 0.0
    %200 = vmatpush1.msra.mxu0 %v68
    %201 = vmatprep.subr.mxu0 0.0
    %202 = vmatpush1.msra.mxu0 %v69
    %203 = vmatprep.subr.mxu0 0.0
    %204 = vmatpush1.msra.mxu0 %v70
    %205 = vmatprep.subr.mxu0 0.0
    %206 = vmatpush1.msra.mxu0 %v71
    %207 = vmatprep.subr.mxu0 0.0
    %208 = vmatpush1.msra.mxu0 %v72
    %209 = vmatprep.subr.mxu0 0.0
    %210 = vmatpush1.msra.mxu0 %v73
    %211 = vmatprep.subr.mxu0 0.0
    %212 = vmatpush1.msra.mxu0 %v74
    %213 = vmatprep.subr.mxu0 0.0
    %214 = vmatpush1.msra.mxu0 %v75
    %215 = vmatprep.subr.mxu0 0.0
    %216 = vmatpush1.msra.mxu0 0.0
    %217 = vmatprep.subr.mxu0 0.0
    %218 = vmatpush1.msra.mxu0 0.0
    %219 = vmatprep.subr.mxu0 0.0
    %220 = vmatpush1.msra.mxu0 0.0
    %221 = vmatprep.subr.mxu0 0.0
    %222 = vmatpush1.msra.mxu0 0.0
    %223 = vmatprep.subr.mxu0 0.0
    %224 = vmatpush1.msra.mxu0 0.0
    %225 = vmatprep.subr.mxu0 0.0
    %226 = vmatpush1.msra.mxu0 0.0
    %227 = vmatprep.subr.mxu0 0.0
    %228 = vmatpush1.msra.mxu0 0.0
    %229 = vmatprep.subr.mxu0 0.0
    %230 = vmatpush1.msra.mxu0 0.0
    %231 = vmatprep.subr.mxu0 0.0
    %232 = vmatpush1.msra.mxu0 0.0
    %233 = vmatprep.subr.mxu0 0.0
    %234 = vmatpush1.msra.mxu0 0.0
    %235 = vmatprep.subr.mxu0 0.0
    %236 = vmatpush1.msra.mxu0 0.0
    %237 = vmatprep.subr.mxu0 0.0
    %238 = vmatpush1.msra.mxu0 0.0
    %239 = vmatprep.subr.mxu0 0.0
    %240 = vmatpush1.msra.mxu0 0.0
    %241 = vmatprep.subr.mxu0 0.0
    %242 = vmatpush1.msra.mxu0 0.0
    %243 = vmatprep.subr.mxu0 0.0
    %244 = vmatpush1.msra.mxu0 0.0
    %245 = vmatprep.subr.mxu0 0.0
    %246 = vmatpush1.msra.mxu0 0.0
    %247 = vmatprep.mubr.f32.mxu0 0.0
    %248 = vmatmul.mubr.f32.gmra.mrb[0].mxu0 %v176
    %v249 = vpop.f32.mrb[0].mxu0
    %v250 = vadd.f32 %v181, %v249
    %v251 = vpop.f32.mrb[0].mxu0
    %252 = vdwg.mxu0
    %v253 = vadd.f32 %v108, %v250
    %254 = vst.msk [vmem:[%s11] sm:$0xff] %vm80, %v253
    %v255 = vld [vmem:[%s0] sm:$0xff]
    %257 = vrot.lane.b32.xlu0 %v255, 96
    %v258 = vpop.permute.xlu0 %257
    %v260 = vsel %vm80, %v258, 0.0
    %261 = vadd.xlane.f32.xlu0 %v260
    %v262 = vpop.xlane.xlu0 %261
    %v263 = vmul.f32 %v262, %v84
    %v264 = vsub.f32 %v255, %v263
    %v265 = vmul.f32 %v264, %v264
    %267 = vrot.lane.b32.xlu0 %v265, 96
    %v268 = vpop.permute.xlu0 %267
    %v270 = vsel %vm80, %v268, 0.0
    %271 = vadd.xlane.f32.xlu0 %v270
    %v272 = vpop.xlane.xlu0 %271
    %v273 = vmul.f32 %v272, %v84
    %v274 = vadd.f32 %v273, 1e-05
    %v275 = vrsqrt.pop %v274
    %v276 = vmul.f32 %v264, %v275
    %277 = vrot.lane.b32.xlu0 %v99, 32
    %v278 = vpop.permute.xlu0 %277
    %v280 = vmul.f32 %v276, %v278
    %281 = vrot.lane.b32.xlu0 %v106, 32
    %v282 = vpop.permute.xlu0 %281
    %v284 = vadd.f32 %v280, %v282
    %v285 = vld [vmem:[%s1] sm:$0xff]
    %287 = vset.pattern.permute.xlu0 1
    %288 = vperm.xlu0 %287, %v285
    %v289 = vpop.permute.xlu0 %288
    %v291 = vmul.f32 %v289, %v119
    %v292 = vadd.f32 %v291, %v126
    %v293 = vmul.f32 %v285, %v129
    %v294 = vadd.f32 %v293, %v131
    %v295 = vmul.f32 %v285, %v285
    %v296 = vmul.f32 %v295, %v134
    %v297 = vmul.f32 %v285, 2.0
    %v298 = vmul.f32 %v297, %v137
    %v299 = vadd.f32 %v296, %v298
    %v300 = vadd.f32 %v299, %v140
    %302 = vset.pattern.permute.xlu0 1
    %303 = vperm.xlu0 %302, %v294
    %v304 = vpop.permute.xlu0 %303
    %v306 = vsub.f32 %v292, %v304
    %v307 = vadd.f32 %v300, 1e-05
    %v308 = vrsqrt.pop %v307
    %310 = vset.pattern.permute.xlu0 1
    %311 = vperm.xlu0 %310, %v308
    %v312 = vpop.permute.xlu0 %311
    %v314 = vmul.f32 %v306, %v312
    %v315 = vmul.f32 %v314, %v160
    %v316 = vadd.f32 %v315, %v167
    %v317 = vxor.u32 %v316, 2147483648
    %v318 = vmul.f32 %v317, 1.442695
    %v319 = vpow.pop %v318
    %v320 = vadd.f32 %v319, 1.0
    %v321 = vrcp.pop %v320
    %v322 = vmul.f32 1.0, %v321
    %v323 = vmul.f32 %v316, %v322
    %324 = vmatprep.subr.mxu0 0.0
    %325 = vmatpush1.msra.mxu0 %v60
    %326 = vmatprep.subr.mxu0 0.0
    %327 = vmatpush1.msra.mxu0 %v61
    %328 = vmatprep.subr.mxu0 0.0
    %329 = vmatpush1.msra.mxu0 %v62
    %330 = vmatprep.subr.mxu0 0.0
    %331 = vmatpush1.msra.mxu0 %v63
    %332 = vmatprep.subr.mxu0 0.0
    %333 = vmatpush1.msra.mxu0 %v64
    %334 = vmatprep.subr.mxu0 0.0
    %335 = vmatpush1.msra.mxu0 %v65
    %336 = vmatprep.subr.mxu0 0.0
    %337 = vmatpush1.msra.mxu0 %v66
    %338 = vmatprep.subr.mxu0 0.0
    %339 = vmatpush1.msra.mxu0 %v67
    %340 = vmatprep.subr.mxu0 0.0
    %341 = vmatpush1.msra.mxu0 %v68
    %342 = vmatprep.subr.mxu0 0.0
    %343 = vmatpush1.msra.mxu0 %v69
    %344 = vmatprep.subr.mxu0 0.0
    %345 = vmatpush1.msra.mxu0 %v70
    %346 = vmatprep.subr.mxu0 0.0
    %347 = vmatpush1.msra.mxu0 %v71
    %348 = vmatprep.subr.mxu0 0.0
    %349 = vmatpush1.msra.mxu0 %v72
    %350 = vmatprep.subr.mxu0 0.0
    %351 = vmatpush1.msra.mxu0 %v73
    %352 = vmatprep.subr.mxu0 0.0
    %353 = vmatpush1.msra.mxu0 %v74
    %354 = vmatprep.subr.mxu0 0.0
    %355 = vmatpush1.msra.mxu0 %v75
    %356 = vmatprep.subr.mxu0 0.0
    %357 = vmatpush1.msra.mxu0 0.0
    %358 = vmatprep.subr.mxu0 0.0
    %359 = vmatpush1.msra.mxu0 0.0
    %360 = vmatprep.subr.mxu0 0.0
    %361 = vmatpush1.msra.mxu0 0.0
    %362 = vmatprep.subr.mxu0 0.0
    %363 = vmatpush1.msra.mxu0 0.0
    %364 = vmatprep.subr.mxu0 0.0
    %365 = vmatpush1.msra.mxu0 0.0
    %366 = vmatprep.subr.mxu0 0.0
    %367 = vmatpush1.msra.mxu0 0.0
    %368 = vmatprep.subr.mxu0 0.0
    %369 = vmatpush1.msra.mxu0 0.0
    %370 = vmatprep.subr.mxu0 0.0
    %371 = vmatpush1.msra.mxu0 0.0
    %372 = vmatprep.subr.mxu0 0.0
    %373 = vmatpush1.msra.mxu0 0.0
    %374 = vmatprep.subr.mxu0 0.0
    %375 = vmatpush1.msra.mxu0 0.0
    %376 = vmatprep.subr.mxu0 0.0
    %377 = vmatpush1.msra.mxu0 0.0
    %378 = vmatprep.subr.mxu0 0.0
    %379 = vmatpush1.msra.mxu0 0.0
    %380 = vmatprep.subr.mxu0 0.0
    %381 = vmatpush1.msra.mxu0 0.0
    %382 = vmatprep.subr.mxu0 0.0
    %383 = vmatpush1.msra.mxu0 0.0
    %384 = vmatprep.subr.mxu0 0.0
    %385 = vmatpush1.msra.mxu0 0.0
    %386 = vmatprep.subr.mxu0 0.0
    %387 = vmatpush1.msra.mxu0 0.0
    %388 = vmatprep.mubr.f32.mxu0 0.0
    %389 = vmatmul.mubr.f32.gmra.mrb[0].mxu0 %v323
    %v390 = vpop.f32.mrb[0].mxu0
    %v391 = vadd.f32 %v181, %v390
    %v392 = vpop.f32.mrb[0].mxu0
    %393 = vdwg.mxu0
    %395 = vrot.lane.b32.xlu0 %v391, 32
    %v396 = vpop.permute.xlu0 %395
    %v398 = vadd.f32 %v284, %v396
    %vm399 = vcmask 523520
    %400 = vst.msk [vmem:[%s11] sm:$0xff] %vm399, %v398
    %v401 = vld [vmem:[%s0] sm:$0xff]
    %403 = vrot.lane.b32.xlu0 %v401, 64
    %v404 = vpop.permute.xlu0 %403
    %v406 = vsel %vm80, %v404, 0.0
    %407 = vadd.xlane.f32.xlu0 %v406
    %v408 = vpop.xlane.xlu0 %407
    %v409 = vmul.f32 %v408, %v84
    %v410 = vsub.f32 %v401, %v409
    %v411 = vmul.f32 %v410, %v410
    %413 = vrot.lane.b32.xlu0 %v411, 64
    %v414 = vpop.permute.xlu0 %413
    %v416 = vsel %vm80, %v414, 0.0
    %417 = vadd.xlane.f32.xlu0 %v416
    %v418 = vpop.xlane.xlu0 %417
    %v419 = vmul.f32 %v418, %v84
    %v420 = vadd.f32 %v419, 1e-05
    %v421 = vrsqrt.pop %v420
    %v422 = vmul.f32 %v410, %v421
    %423 = vrot.lane.b32.xlu0 %v99, 64
    %v424 = vpop.permute.xlu0 %423
    %v426 = vmul.f32 %v422, %v424
    %427 = vrot.lane.b32.xlu0 %v106, 64
    %v428 = vpop.permute.xlu0 %427
    %v430 = vadd.f32 %v426, %v428
    %v431 = vld [vmem:[%s1] sm:$0xff]
    %433 = vset.pattern.permute.xlu0 2
    %434 = vperm.xlu0 %433, %v431
    %v435 = vpop.permute.xlu0 %434
    %v437 = vmul.f32 %v435, %v119
    %v438 = vadd.f32 %v437, %v126
    %v439 = vmul.f32 %v431, %v129
    %v440 = vadd.f32 %v439, %v131
    %v441 = vmul.f32 %v431, %v431
    %v442 = vmul.f32 %v441, %v134
    %v443 = vmul.f32 %v431, 2.0
    %v444 = vmul.f32 %v443, %v137
    %v445 = vadd.f32 %v442, %v444
    %v446 = vadd.f32 %v445, %v140
    %448 = vset.pattern.permute.xlu0 2
    %449 = vperm.xlu0 %448, %v440
    %v450 = vpop.permute.xlu0 %449
    %v452 = vsub.f32 %v438, %v450
    %v453 = vadd.f32 %v446, 1e-05
    %v454 = vrsqrt.pop %v453
    %456 = vset.pattern.permute.xlu0 2
    %457 = vperm.xlu0 %456, %v454
    %v458 = vpop.permute.xlu0 %457
    %v460 = vmul.f32 %v452, %v458
    %v461 = vmul.f32 %v460, %v160
    %v462 = vadd.f32 %v461, %v167
    %v463 = vxor.u32 %v462, 2147483648
    %v464 = vmul.f32 %v463, 1.442695
    %v465 = vpow.pop %v464
    %v466 = vadd.f32 %v465, 1.0
    %v467 = vrcp.pop %v466
    %v468 = vmul.f32 1.0, %v467
    %v469 = vmul.f32 %v462, %v468
    %470 = vmatprep.subr.mxu0 0.0
    %471 = vmatpush1.msra.mxu0 %v60
    %472 = vmatprep.subr.mxu0 0.0
    %473 = vmatpush1.msra.mxu0 %v61
    %474 = vmatprep.subr.mxu0 0.0
    %475 = vmatpush1.msra.mxu0 %v62
    %476 = vmatprep.subr.mxu0 0.0
    %477 = vmatpush1.msra.mxu0 %v63
    %478 = vmatprep.subr.mxu0 0.0
    %479 = vmatpush1.msra.mxu0 %v64
    %480 = vmatprep.subr.mxu0 0.0
    %481 = vmatpush1.msra.mxu0 %v65
    %482 = vmatprep.subr.mxu0 0.0
    %483 = vmatpush1.msra.mxu0 %v66
    %484 = vmatprep.subr.mxu0 0.0
    %485 = vmatpush1.msra.mxu0 %v67
    %486 = vmatprep.subr.mxu0 0.0
    %487 = vmatpush1.msra.mxu0 %v68
    %488 = vmatprep.subr.mxu0 0.0
    %489 = vmatpush1.msra.mxu0 %v69
    %490 = vmatprep.subr.mxu0 0.0
    %491 = vmatpush1.msra.mxu0 %v70
    %492 = vmatprep.subr.mxu0 0.0
    %493 = vmatpush1.msra.mxu0 %v71
    %494 = vmatprep.subr.mxu0 0.0
    %495 = vmatpush1.msra.mxu0 %v72
    %496 = vmatprep.subr.mxu0 0.0
    %497 = vmatpush1.msra.mxu0 %v73
    %498 = vmatprep.subr.mxu0 0.0
    %499 = vmatpush1.msra.mxu0 %v74
    %500 = vmatprep.subr.mxu0 0.0
    %501 = vmatpush1.msra.mxu0 %v75
    %502 = vmatprep.subr.mxu0 0.0
    %503 = vmatpush1.msra.mxu0 0.0
    %504 = vmatprep.subr.mxu0 0.0
    %505 = vmatpush1.msra.mxu0 0.0
    %506 = vmatprep.subr.mxu0 0.0
    %507 = vmatpush1.msra.mxu0 0.0
    %508 = vmatprep.subr.mxu0 0.0
    %509 = vmatpush1.msra.mxu0 0.0
    %510 = vmatprep.subr.mxu0 0.0
    %511 = vmatpush1.msra.mxu0 0.0
    %512 = vmatprep.subr.mxu0 0.0
    %513 = vmatpush1.msra.mxu0 0.0
    %514 = vmatprep.subr.mxu0 0.0
    %515 = vmatpush1.msra.mxu0 0.0
    %516 = vmatprep.subr.mxu0 0.0
    %517 = vmatpush1.msra.mxu0 0.0
    %518 = vmatprep.subr.mxu0 0.0
    %519 = vmatpush1.msra.mxu0 0.0
    %520 = vmatprep.subr.mxu0 0.0
    %521 = vmatpush1.msra.mxu0 0.0
    %522 = vmatprep.subr.mxu0 0.0
    %523 = vmatpush1.msra.mxu0 0.0
    %524 = vmatprep.subr.mxu0 0.0
    %525 = vmatpush1.msra.mxu0 0.0
    %526 = vmatprep.subr.mxu0 0.0
    %527 = vmatpush1.msra.mxu0 0.0
    %528 = vmatprep.subr.mxu0 0.0
    %529 = vmatpush1.msra.mxu0 0.0
    %530 = vmatprep.subr.mxu0 0.0
    %531 = vmatpush1.msra.mxu0 0.0
    %532 = vmatprep.subr.mxu0 0.0
    %533 = vmatpush1.msra.mxu0 0.0
    %534 = vmatprep.mubr.f32.mxu0 0.0
    %535 = vmatmul.mubr.f32.gmra.mrb[0].mxu0 %v469
    %v536 = vpop.f32.mrb[0].mxu0
    %v537 = vadd.f32 %v181, %v536
    %v538 = vpop.f32.mrb[0].mxu0
    %539 = vdwg.mxu0
    %541 = vrot.lane.b32.xlu0 %v537, 64
    %v542 = vpop.permute.xlu0 %541
    %v544 = vadd.f32 %v430, %v542
    %vm545 = vcmask 785920
    %546 = vst.msk [vmem:[%s11] sm:$0xff] %vm545, %v544
    %v547 = vld [vmem:[%s0] sm:$0xff]
    %549 = vrot.lane.b32.xlu0 %v547, 32
    %v550 = vpop.permute.xlu0 %549
    %v552 = vsel %vm80, %v550, 0.0
    %553 = vadd.xlane.f32.xlu0 %v552
    %v554 = vpop.xlane.xlu0 %553
    %v555 = vmul.f32 %v554, %v84
    %v556 = vsub.f32 %v547, %v555
    %v557 = vmul.f32 %v556, %v556
    %559 = vrot.lane.b32.xlu0 %v557, 32
    %v560 = vpop.permute.xlu0 %559
    %v562 = vsel %vm80, %v560, 0.0
    %563 = vadd.xlane.f32.xlu0 %v562
    %v564 = vpop.xlane.xlu0 %563
    %v565 = vmul.f32 %v564, %v84
    %v566 = vadd.f32 %v565, 1e-05
    %v567 = vrsqrt.pop %v566
    %v568 = vmul.f32 %v556, %v567
    %569 = vrot.lane.b32.xlu0 %v99, 96
    %v570 = vpop.permute.xlu0 %569
    %v572 = vmul.f32 %v568, %v570
    %573 = vrot.lane.b32.xlu0 %v106, 96
    %v574 = vpop.permute.xlu0 %573
    %v576 = vadd.f32 %v572, %v574
    %v577 = vld [vmem:[%s1] sm:$0xff]
    %579 = vset.pattern.permute.xlu0 3
    %580 = vperm.xlu0 %579, %v577
    %v581 = vpop.permute.xlu0 %580
    %v583 = vmul.f32 %v581, %v119
    %v584 = vadd.f32 %v583, %v126
    %v585 = vmul.f32 %v577, %v129
    %v586 = vadd.f32 %v585, %v131
    %v587 = vmul.f32 %v577, %v577
    %v588 = vmul.f32 %v587, %v134
    %v589 = vmul.f32 %v577, 2.0
    %v590 = vmul.f32 %v589, %v137
    %v591 = vadd.f32 %v588, %v590
    %v592 = vadd.f32 %v591, %v140
    %594 = vset.pattern.permute.xlu0 3
    %595 = vperm.xlu0 %594, %v586
    %v596 = vpop.permute.xlu0 %595
    %v598 = vsub.f32 %v584, %v596
    %v599 = vadd.f32 %v592, 1e-05
    %v600 = vrsqrt.pop %v599
    %602 = vset.pattern.permute.xlu0 3
    %603 = vperm.xlu0 %602, %v600
    %v604 = vpop.permute.xlu0 %603
    %v606 = vmul.f32 %v598, %v604
    %v607 = vmul.f32 %v606, %v160
    %v608 = vadd.f32 %v607, %v167
    %v609 = vxor.u32 %v608, 2147483648
    %v610 = vmul.f32 %v609, 1.442695
    %v611 = vpow.pop %v610
    %v612 = vadd.f32 %v611, 1.0
    %v613 = vrcp.pop %v612
    %v614 = vmul.f32 1.0, %v613
    %v615 = vmul.f32 %v608, %v614
    %616 = vmatprep.subr.mxu0 0.0
    %617 = vmatpush1.msra.mxu0 %v60
    %618 = vmatprep.subr.mxu0 0.0
    %619 = vmatpush1.msra.mxu0 %v61
    %620 = vmatprep.subr.mxu0 0.0
    %621 = vmatpush1.msra.mxu0 %v62
    %622 = vmatprep.subr.mxu0 0.0
    %623 = vmatpush1.msra.mxu0 %v63
    %624 = vmatprep.subr.mxu0 0.0
    %625 = vmatpush1.msra.mxu0 %v64
    %626 = vmatprep.subr.mxu0 0.0
    %627 = vmatpush1.msra.mxu0 %v65
    %628 = vmatprep.subr.mxu0 0.0
    %629 = vmatpush1.msra.mxu0 %v66
    %630 = vmatprep.subr.mxu0 0.0
    %631 = vmatpush1.msra.mxu0 %v67
    %632 = vmatprep.subr.mxu0 0.0
    %633 = vmatpush1.msra.mxu0 %v68
    %634 = vmatprep.subr.mxu0 0.0
    %635 = vmatpush1.msra.mxu0 %v69
    %636 = vmatprep.subr.mxu0 0.0
    %637 = vmatpush1.msra.mxu0 %v70
    %638 = vmatprep.subr.mxu0 0.0
    %639 = vmatpush1.msra.mxu0 %v71
    %640 = vmatprep.subr.mxu0 0.0
    %641 = vmatpush1.msra.mxu0 %v72
    %642 = vmatprep.subr.mxu0 0.0
    %643 = vmatpush1.msra.mxu0 %v73
    %644 = vmatprep.subr.mxu0 0.0
    %645 = vmatpush1.msra.mxu0 %v74
    %646 = vmatprep.subr.mxu0 0.0
    %647 = vmatpush1.msra.mxu0 %v75
    %648 = vmatprep.subr.mxu0 0.0
    %649 = vmatpush1.msra.mxu0 0.0
    %650 = vmatprep.subr.mxu0 0.0
    %651 = vmatpush1.msra.mxu0 0.0
    %652 = vmatprep.subr.mxu0 0.0
    %653 = vmatpush1.msra.mxu0 0.0
    %654 = vmatprep.subr.mxu0 0.0
    %655 = vmatpush1.msra.mxu0 0.0
    %656 = vmatprep.subr.mxu0 0.0
    %657 = vmatpush1.msra.mxu0 0.0
    %658 = vmatprep.subr.mxu0 0.0
    %659 = vmatpush1.msra.mxu0 0.0
    %660 = vmatprep.subr.mxu0 0.0
    %661 = vmatpush1.msra.mxu0 0.0
    %662 = vmatprep.subr.mxu0 0.0
    %663 = vmatpush1.msra.mxu0 0.0
    %664 = vmatprep.subr.mxu0 0.0
    %665 = vmatpush1.msra.mxu0 0.0
    %666 = vmatprep.subr.mxu0 0.0
    %667 = vmatpush1.msra.mxu0 0.0
    %668 = vmatprep.subr.mxu0 0.0
    %669 = vmatpush1.msra.mxu0 0.0
    %670 = vmatprep.subr.mxu0 0.0
    %671 = vmatpush1.msra.mxu0 0.0
    %672 = vmatprep.subr.mxu0 0.0
    %673 = vmatpush1.msra.mxu0 0.0
    %674 = vmatprep.subr.mxu0 0.0
    %675 = vmatpush1.msra.mxu0 0.0
    %676 = vmatprep.subr.mxu0 0.0
    %677 = vmatpush1.msra.mxu0 0.0
    %678 = vmatprep.subr.mxu0 0.0
    %679 = vmatpush1.msra.mxu0 0.0
    %680 = vmatprep.mubr.f32.mxu0 0.0
    %681 = vmatmul.mubr.f32.gmra.mrb[0].mxu0 %v615
    %v682 = vpop.f32.mrb[0].mxu0
    %v683 = vadd.f32 %v181, %v682
    %v684 = vpop.f32.mrb[0].mxu0
    %685 = vdwg.mxu0
    %687 = vrot.lane.b32.xlu0 %v683, 96
    %v688 = vpop.permute.xlu0 %687
    %v690 = vadd.f32 %v576, %v688
    %vm691 = vcmask 1048320
    %692 = vst.msk [vmem:[%s11] sm:$0xff] %vm691, %v690
    // Predicated region
    $region50: #{myembed_forward.1} parent=1 // pred_check
      _
    $region51: #{myembed_forward.1} parent=1 // pred_check_branch
      %694 = sbr.rel (0) target = $region53
    $region52: #{myembed_forward.1} parent=1 // pred_region
      _
    $region53: #{myembed_forward.1} parent=1 // pred_fallthru
      _
    // Predicated region
    $region54: #{myembed_forward.1} parent=1 // pred_check
      _
    $region55: #{myembed_forward.1} parent=1 // pred_check_branch
      %696 = sbr.rel (0) target = $region57
    $region56: #{myembed_forward.1} parent=1 // pred_region
      _
    $region57: #{myembed_forward.1} parent=1 // pred_fallthru
      _
    %697 = vsyncpa [#allocation3], 1

</llo_original>
